<compile_context>
chip_gen: v6e
topology: v6e:2x2x1
jax: 0.10.0
libtpu: 0.0.40
codegen_flags: <defaults>
</compile_context>

<pallas_src>
import jax
import jax.numpy as jnp
from jax.experimental import pallas as pl
from jax.experimental.pallas import tpu as pltpu


# ---------------------------------------------------------------------------
# Pallas kernels
# ---------------------------------------------------------------------------
# Grid: a single trailing "arbitrary" axis over blocks of BE edges (edges are
# CSR-ordered).  Per block: compute per-edge features, build a block-local
# one-hot (segments x BE) from the int32 segment ids (never materialized in
# HBM as a dense (N, E) matrix), and accumulate the per-segment sums into a
# f32 VMEM scratch.  At the last block, one fused bf16 MXU matmul produces the
# 128-lane-padded (lane-dense) output.

def _t_branch_kernel(seg_ref, a_e_ref, v_e_ref, wav_ref, t_emb_ref, w1_ref,
                     a_emb_ref, wa_ref, t_out_ref, a_out_ref, seg_acc):
    e = pl.program_id(0)
    nt_pad = seg_acc.shape[0]
    be = seg_ref.shape[1]
    bf16 = jnp.bfloat16

    @pl.when(e == 0)
    def _init():
        seg_acc[...] = jnp.zeros_like(seg_acc)

    # a_v = a_embed[a_list] * v_embed[v_list]            (f32 elementwise)
    a_v = a_e_ref[...] * v_e_ref[...]                                  # (BE, a_dim)
    # agg_embed = (wa_v @ a_v.T).T == a_v @ wa_v.T       (bf16 MXU, f32 acc)
    agg = jnp.dot(a_v.astype(bf16), wav_ref[...].T.astype(bf16),
                  preferred_element_type=jnp.float32)                  # (BE, t_dim)
    # segment_csr(agg, ptr_t, reduce="sum"): block-local one-hot reduction.
    rows = jax.lax.broadcasted_iota(jnp.int32, (nt_pad, be), 0)
    onehot = jnp.where(seg_ref[...] == rows, 1.0, 0.0).astype(bf16)    # (Nt_pad, BE)
    seg_acc[...] += jnp.dot(onehot, agg.astype(bf16),
                            preferred_element_type=jnp.float32)        # (Nt_pad, t_dim)

    @pl.when(e == pl.num_programs(0) - 1)
    def _finalize():
        # w1 @ cat([t_embed, out], 1).T  ->  one fused K = 2*t_dim dot.
        cat = jnp.concatenate([t_emb_ref[...], seg_acc[...]], axis=1)  # (Nt_pad, 2*t_dim)
        t_out_ref[...] = jnp.dot(cat.astype(bf16),
                                 w1_ref[...].T.astype(bf16),
                                 preferred_element_type=jnp.float32)
        # Fused third output: a_embed @ wa (lane-dense 128-wide padded).
        a_out_ref[...] = jnp.dot(a_emb_ref[...].astype(bf16),
                                 wa_ref[...].astype(bf16),
                                 preferred_element_type=jnp.float32)


def _v_branch_kernel(seg_ref, t_e_ref, a_e_ref, wt_ref, wat_ref, v_emb_ref,
                     w2_ref, v_out_ref, seg_acc):
    e = pl.program_id(0)
    nv_pad = seg_acc.shape[0]
    be = seg_ref.shape[1]
    bf16 = jnp.bfloat16

    @pl.when(e == 0)
    def _init():
        seg_acc[...] = jnp.zeros_like(seg_acc)

    # tuple_embed = (wt @ t_embed[t_list].T).T == t_e @ wt.T
    tuple_e = jnp.dot(t_e_ref[...].astype(bf16), wt_ref[...].T.astype(bf16),
                      preferred_element_type=jnp.float32)              # (BE, v_dim)
    # att_embed2 = (wa_t @ a_embed[a_list].T).T == a_e @ wa_t.T
    att_e = jnp.dot(a_e_ref[...].astype(bf16), wat_ref[...].T.astype(bf16),
                    preferred_element_type=jnp.float32)                # (BE, v_dim)
    agg2 = att_e * tuple_e                                             # f32 elementwise
    # segment_csr(agg2, ptr_v, out=zeros, reduce="sum")
    rows = jax.lax.broadcasted_iota(jnp.int32, (nv_pad, be), 0)
    onehot = jnp.where(seg_ref[...] == rows, 1.0, 0.0).astype(bf16)    # (Nv_pad, BE)
    seg_acc[...] += jnp.dot(onehot, agg2.astype(bf16),
                            preferred_element_type=jnp.float32)        # (Nv_pad, v_dim)

    @pl.when(e == pl.num_programs(0) - 1)
    def _finalize():
        cat = jnp.concatenate([v_emb_ref[...], seg_acc[...]], axis=1)  # (Nv_pad, 2*v_dim)
        v_out_ref[...] = jnp.dot(cat.astype(bf16),
                                 w2_ref[...].T.astype(bf16),
                                 preferred_element_type=jnp.float32)


# ---------------------------------------------------------------------------
# Wrapper
# ---------------------------------------------------------------------------

def _round_up(x, m):
    return ((x + m - 1) // m) * m


def aggregator1_forward(params, t_info, v_info, t_embed, v_embed, a_embed,
                        name="sum", edge_block=128):
    if name != "sum":
        # TODO(synk): segment_csr reduce in {"mean","max","min"} not implemented.
        raise NotImplementedError("only reduce='sum' is implemented")

    ptr_t, a_list1, v_list1 = t_info
    ptr_v, a_list2, t_list2 = v_info
    Nt, t_dim = t_embed.shape
    Nv, v_dim = v_embed.shape
    Na, a_dim = a_embed.shape
    E1 = a_list1.shape[0]
    E2 = a_list2.shape[0]
    t_outdim = params["w1"].shape[0]
    v_outdim = params["w2"].shape[0]
    a_outdim = params["wa"].shape[1]
    # The module implicitly requires v_dim == a_dim (a_embed[a_list] * v_embed[v_list]).

    f32 = jnp.float32
    OUT_PAD = 128                                 # lane-dense output feature width
    BE = edge_block                               # edge block (reduction tile)
    E1p = max(_round_up(E1, BE), BE)
    E2p = max(_round_up(E2, BE), BE)
    NT_PAD = _round_up(Nt, 8)
    NV_PAD = _round_up(Nv, 8)
    NA_PAD = _round_up(Na, 8)

    # --- glue: edge gathers (XLA gather), zero-padded to a whole edge block ---
    a_e1 = jnp.pad(a_embed[a_list1], ((0, E1p - E1), (0, 0)))          # (E1p, a_dim)
    v_e1 = jnp.pad(v_embed[v_list1], ((0, E1p - E1), (0, 0)))          # (E1p, v_dim)
    t_e2 = jnp.pad(t_embed[t_list2], ((0, E2p - E2), (0, 0)))          # (E2p, t_dim)
    a_e2 = jnp.pad(a_embed[a_list2], ((0, E2p - E2), (0, 0)))          # (E2p, a_dim)

    # --- glue: CSR ptr -> per-edge segment ids (tiny int32; replaces dense S) ---
    seg1 = jnp.searchsorted(ptr_t[1:], jnp.arange(E1), side="right").astype(jnp.int32)
    seg1 = jnp.pad(seg1, (0, E1p - E1), constant_values=-1).reshape(1, E1p)
    seg2 = jnp.searchsorted(ptr_v[1:], jnp.arange(E2), side="right").astype(jnp.int32)
    seg2 = jnp.pad(seg2, (0, E2p - E2), constant_values=-1).reshape(1, E2p)

    # --- padded node embeddings and lane-dense (128-wide) padded weights ---
    t_emb_p = jnp.pad(t_embed, ((0, NT_PAD - Nt), (0, 0)))
    v_emb_p = jnp.pad(v_embed, ((0, NV_PAD - Nv), (0, 0)))
    a_emb_p = jnp.pad(a_embed, ((0, NA_PAD - Na), (0, 0)))
    w1p = jnp.pad(params["w1"], ((0, OUT_PAD - t_outdim), (0, 0)))     # (128, 2*t_dim)
    w2p = jnp.pad(params["w2"], ((0, OUT_PAD - v_outdim), (0, 0)))     # (128, 2*v_dim)
    wap = jnp.pad(params["wa"], ((0, 0), (0, OUT_PAD - a_outdim)))     # (a_dim, 128)

    nE1 = E1p // BE
    nE2 = E2p // BE
    cparams = pltpu.CompilerParams(dimension_semantics=("arbitrary",),
                                   vmem_limit_bytes=32 * 1024 * 1024)

    t_out_p, a_out_p = pl.pallas_call(
        _t_branch_kernel,
        out_shape=(jax.ShapeDtypeStruct((NT_PAD, OUT_PAD), f32),
                   jax.ShapeDtypeStruct((NA_PAD, OUT_PAD), f32)),
        grid_spec=pltpu.PrefetchScalarGridSpec(
            num_scalar_prefetch=0,
            grid=(nE1,),
            in_specs=[
                pl.BlockSpec((1, BE), lambda e: (0, e)),              # segment ids
                pl.BlockSpec((BE, a_dim), lambda e: (e, 0)),          # a_embed[a_list1]
                pl.BlockSpec((BE, v_dim), lambda e: (e, 0)),          # v_embed[v_list1]
                pl.BlockSpec((t_dim, a_dim), lambda e: (0, 0)),       # wa_v   (resident)
                pl.BlockSpec((NT_PAD, t_dim), lambda e: (0, 0)),      # t_embed (resident)
                pl.BlockSpec((OUT_PAD, 2 * t_dim), lambda e: (0, 0)), # w1     (resident)
                pl.BlockSpec((NA_PAD, a_dim), lambda e: (0, 0)),      # a_embed (resident)
                pl.BlockSpec((a_dim, OUT_PAD), lambda e: (0, 0)),     # wa     (resident)
            ],
            out_specs=[
                pl.BlockSpec((NT_PAD, OUT_PAD), lambda e: (0, 0)),
                pl.BlockSpec((NA_PAD, OUT_PAD), lambda e: (0, 0)),
            ],
            scratch_shapes=[pltpu.VMEM((NT_PAD, t_dim), f32)]),
        compiler_params=cparams,
    )(seg1, a_e1, v_e1, params["wa_v"], t_emb_p, w1p, a_emb_p, wap)

    v_out_p = pl.pallas_call(
        _v_branch_kernel,
        out_shape=jax.ShapeDtypeStruct((NV_PAD, OUT_PAD), f32),
        grid_spec=pltpu.PrefetchScalarGridSpec(
            num_scalar_prefetch=0,
            grid=(nE2,),
            in_specs=[
                pl.BlockSpec((1, BE), lambda e: (0, e)),              # segment ids
                pl.BlockSpec((BE, t_dim), lambda e: (e, 0)),          # t_embed[t_list2]
                pl.BlockSpec((BE, a_dim), lambda e: (e, 0)),          # a_embed[a_list2]
                pl.BlockSpec((v_dim, t_dim), lambda e: (0, 0)),       # wt     (resident)
                pl.BlockSpec((v_dim, a_dim), lambda e: (0, 0)),       # wa_t   (resident)
                pl.BlockSpec((NV_PAD, v_dim), lambda e: (0, 0)),      # v_embed (resident)
                pl.BlockSpec((OUT_PAD, 2 * v_dim), lambda e: (0, 0)), # w2     (resident)
            ],
            out_specs=pl.BlockSpec((NV_PAD, OUT_PAD), lambda e: (0, 0)),
            scratch_shapes=[pltpu.VMEM((NV_PAD, v_dim), f32)]),
        compiler_params=cparams,
    )(seg2, t_e2, a_e2, params["wt"], params["wa_t"], v_emb_p, w2p)

    return (t_out_p[:Nt, :t_outdim],
            v_out_p[:Nv, :v_outdim],
            a_out_p[:Na, :a_outdim])


# ---------------------------------------------------------------------------
# Pure-JAX reference (mirrors the PyTorch forward exactly, reduce="sum")
# ---------------------------------------------------------------------------

def aggregator1_reference(params, t_info, v_info, t_embed, v_embed, a_embed):
    ptr_t, a_list1, v_list1 = t_info
    ptr_v, a_list2, t_list2 = v_info
    E1, E2 = a_list1.shape[0], a_list2.shape[0]

    a_v = a_embed[a_list1] * v_embed[v_list1]
    agg = a_v @ params["wa_v"].T
    seg1 = jnp.searchsorted(ptr_t[1:], jnp.arange(E1), side="right")
    out = jax.ops.segment_sum(agg, seg1, num_segments=t_embed.shape[0])
    t_up = jnp.concatenate([t_embed, out], axis=1) @ params["w1"].T

    tuple_e = t_embed[t_list2] @ params["wt"].T
    att_e = a_embed[a_list2] @ params["wa_t"].T
    agg2 = att_e * tuple_e
    seg2 = jnp.searchsorted(ptr_v[1:], jnp.arange(E2), side="right")
    out2 = jax.ops.segment_sum(agg2, seg2, num_segments=v_embed.shape[0])
    v_up = jnp.concatenate([v_embed, out2], axis=1) @ params["w2"].T

    return t_up, v_up, a_embed @ params["wa"]


# ---------------------------------------------------------------------------
# Deterministic parameter init (PyTorch xavier_uniform_ semantics for 2-D)
# ---------------------------------------------------------------------------

def xavier_uniform(key, shape):
    fan_out, fan_in = shape
    limit = (6.0 / (fan_in + fan_out)) ** 0.5
    return jax.random.uniform(key, shape, jnp.float32, -limit, limit)


if __name__ == "__main__":
    key = jax.random.PRNGKey(0)
    keys = jax.random.split(key, 16)

    # module dims (v_dim == a_dim is required by a_embed[a_list] * v_embed[v_list])
    t_dim = v_dim = a_dim = 32
    t_outdim, v_outdim, a_outdim = 16, 24, 8
    Nt, Nv, Na = 6, 5, 7

    params = {
        "wv":   xavier_uniform(keys[0], (t_dim, v_dim)),   # unused in forward (kept for fidelity)
        "wt":   xavier_uniform(keys[1], (v_dim, t_dim)),
        "wa_t": xavier_uniform(keys[2], (v_dim, a_dim)),
        "w1":   xavier_uniform(keys[3], (t_outdim, 2 * t_dim)),
        "w2":   xavier_uniform(keys[4], (v_outdim, 2 * v_dim)),
        "wa":   xavier_uniform(keys[5], (a_dim, a_outdim)),
        "wa_v": xavier_uniform(keys[6], (t_dim, a_dim)),
    }

    t_embed = jax.random.normal(keys[7], (Nt, t_dim), jnp.float32)
    v_embed = jax.random.normal(keys[8], (Nv, v_dim), jnp.float32)
    a_embed = jax.random.normal(keys[9], (Na, a_dim), jnp.float32)

    # t_info: CSR over Nt segments, E1 = 12 edges
    counts_t = jnp.array([3, 2, 0, 4, 1, 2], jnp.int32)
    ptr_t = jnp.concatenate([jnp.zeros((1,), jnp.int32), jnp.cumsum(counts_t)])
    E1 = int(counts_t.sum())
    a_list1 = jax.random.randint(keys[10], (E1,), 0, Na)
    v_list1 = jax.random.randint(keys[11], (E1,), 0, Nv)
    t_info = (ptr_t, a_list1, v_list1)

    # v_info: CSR over Nv segments, E2 = 10 edges
    counts_v = jnp.array([2, 3, 1, 0, 4], jnp.int32)
    ptr_v = jnp.concatenate([jnp.zeros((1,), jnp.int32), jnp.cumsum(counts_v)])
    E2 = int(counts_v.sum())
    a_list2 = jax.random.randint(keys[12], (E2,), 0, Na)
    t_list2 = jax.random.randint(keys[13], (E2,), 0, Nt)
    v_info = (ptr_v, a_list2, t_list2)

    t_up, v_up, a_up = aggregator1_forward(
        params, t_info, v_info, t_embed, v_embed, a_embed, name="sum")
    jax.block_until_ready((t_up, v_up, a_up))

    t_ref, v_ref, a_ref = aggregator1_reference(
        params, t_info, v_info, t_embed, v_embed, a_embed)

    assert t_up.shape == (Nt, t_outdim) and v_up.shape == (Nv, v_outdim) and a_up.shape == (Na, a_outdim)
    assert jnp.allclose(t_up, t_ref, rtol=5e-2, atol=5e-2)
    assert jnp.allclose(v_up, v_ref, rtol=5e-2, atol=5e-2)
    assert jnp.allclose(a_up, a_ref, rtol=5e-2, atol=5e-2)

    print("KERNEL_OK")
</pallas_src>

<mosaic_0001>
module attributes {stable_mosaic.version = 11 : i64} {
  func.func @_t_branch_kernel(%arg0: i32, %arg1: memref<1x128xi32, #tpu.memory_space<vmem>>, %arg2: memref<128x32xf32, #tpu.memory_space<vmem>>, %arg3: memref<128x32xf32, #tpu.memory_space<vmem>>, %arg4: memref<32x32xf32, #tpu.memory_space<vmem>>, %arg5: memref<8x32xf32, #tpu.memory_space<vmem>>, %arg6: memref<128x64xf32, #tpu.memory_space<vmem>>, %arg7: memref<8x32xf32, #tpu.memory_space<vmem>>, %arg8: memref<32x128xf32, #tpu.memory_space<vmem>>, %arg9: memref<8x128xf32, #tpu.memory_space<vmem>>, %arg10: memref<8x128xf32, #tpu.memory_space<vmem>>, %arg11: memref<8x32xf32, #tpu.memory_space<vmem>>) attributes {dimension_semantics = [#tpu.dimension_semantics<arbitrary>], iteration_bounds = array<i64: 1>, scalar_prefetch = 0 : i64, scratch_operands = 1 : i64, tpu.core_type = #tpu.core_type<tc>, window_params = [{transform_indices = @transform_0, window_bounds = array<i64: 1, 128>}, {transform_indices = @transform_1, window_bounds = array<i64: 128, 32>}, {transform_indices = @transform_2, window_bounds = array<i64: 128, 32>}, {pipeline_mode = #tpu.pipeline_mode<synchronous>, transform_indices = @transform_3, window_bounds = array<i64: 32, 32>}, {pipeline_mode = #tpu.pipeline_mode<synchronous>, transform_indices = @transform_4, window_bounds = array<i64: 8, 32>}, {pipeline_mode = #tpu.pipeline_mode<synchronous>, transform_indices = @transform_5, window_bounds = array<i64: 128, 64>}, {pipeline_mode = #tpu.pipeline_mode<synchronous>, transform_indices = @transform_6, window_bounds = array<i64: 8, 32>}, {pipeline_mode = #tpu.pipeline_mode<synchronous>, transform_indices = @transform_7, window_bounds = array<i64: 32, 128>}, {pipeline_mode = #tpu.pipeline_mode<synchronous>, transform_indices = @transform_8, window_bounds = array<i64: 8, 128>}, {pipeline_mode = #tpu.pipeline_mode<synchronous>, transform_indices = @transform_9, window_bounds = array<i64: 8, 128>}]} {
    %c0_i32 = arith.constant 0 : i32
    %0 = arith.cmpi eq, %arg0, %c0_i32 : i32
    %1 = arith.extui %0 : i1 to i32
    %c0_i32_0 = arith.constant 0 : i32
    %2 = arith.cmpi ne, %1, %c0_i32_0 : i32
    scf.if %2 {
      %cst_17 = arith.constant 0.000000e+00 : f32
      %27 = vector.broadcast %cst_17 : f32 to vector<8x32xf32>
      %c0_18 = arith.constant 0 : index
      %c0_19 = arith.constant 0 : index
      %28 = vector.load %arg11[%c0_18, %c0_19] : memref<8x32xf32, #tpu.memory_space<vmem>>, vector<8x32xf32>
      tpu.vector_store %arg11[%c0_18, %c0_19], %27 {strides = array<i32>} : memref<8x32xf32, #tpu.memory_space<vmem>>, vector<8x32xf32>,
    } else {
    }
    %c0 = arith.constant 0 : index
    %c0_1 = arith.constant 0 : index
    %3 = vector.load %arg2[%c0, %c0_1] : memref<128x32xf32, #tpu.memory_space<vmem>>, vector<128x32xf32>
    %c0_2 = arith.constant 0 : index
    %c0_3 = arith.constant 0 : index
    %4 = vector.load %arg3[%c0_2, %c0_3] : memref<128x32xf32, #tpu.memory_space<vmem>>, vector<128x32xf32>
    %5 = arith.mulf %3, %4 : vector<128x32xf32>
    %6 = arith.truncf %5 : vector<128x32xf32> to vector<128x32xbf16>
    %c0_4 = arith.constant 0 : index
    %c0_5 = arith.constant 0 : index
    %7 = vector.load %arg4[%c0_4, %c0_5] : memref<32x32xf32, #tpu.memory_space<vmem>>, vector<32x32xf32>
    %8 = tpu.transpose %7, [1, 0] : vector<32x32xf32> -> vector<32x32xf32>
    %9 = arith.truncf %8 : vector<32x32xf32> to vector<32x32xbf16>
    %cst = arith.constant dense<0.000000e+00> : vector<128x32xf32>
    %10 = tpu.matmul %6, %9, %cst {dimension_numbers = #tpu.dot_dimension_numbers<[1], [0], [0], [1], [0, 0, 1, 1], [], []>} : vector<128x32xbf16>, vector<32x32xbf16>, vector<128x32xf32> -> vector<128x32xf32>
    %11 = tpu.iota {dimensions = array<i32: 0>} : vector<8x128xi32>
    %c0_6 = arith.constant 0 : index
    %c0_7 = arith.constant 0 : index
    %12 = vector.load %arg1[%c0_6, %c0_7] : memref<1x128xi32, #tpu.memory_space<vmem>>, vector<1x128xi32>
    %13 = vector.broadcast %12 : vector<1x128xi32> to vector<8x128xi32>
    %14 = arith.cmpi eq, %13, %11 : vector<8x128xi32>
    %cst_8 = arith.constant 1.000000e+00 : f32
    %cst_9 = arith.constant 0.000000e+00 : f32
    %15 = vector.broadcast %cst_8 : f32 to vector<8x128xf32>
    %16 = vector.broadcast %cst_9 : f32 to vector<8x128xf32>
    %17 = arith.select %14, %15, %16 : vector<8x128xi1>, vector<8x128xf32>
    %18 = arith.truncf %17 : vector<8x128xf32> to vector<8x128xbf16>
    %c0_10 = arith.constant 0 : index
    %c0_11 = arith.constant 0 : index
    %19 = vector.load %arg11[%c0_10, %c0_11] : memref<8x32xf32, #tpu.memory_space<vmem>>, vector<8x32xf32>
    %20 = arith.truncf %10 : vector<128x32xf32> to vector<128x32xbf16>
    %cst_12 = arith.constant dense<0.000000e+00> : vector<8x32xf32>
    %21 = tpu.matmul %18, %20, %cst_12 {dimension_numbers = #tpu.dot_dimension_numbers<[1], [0], [0], [1], [0, 0, 1, 1], [], []>} : vector<8x128xbf16>, vector<128x32xbf16>, vector<8x32xf32> -> vector<8x32xf32>
    %22 = arith.addf %19, %21 : vector<8x32xf32>
    %c0_13 = arith.constant 0 : index
    %c0_14 = arith.constant 0 : index
    %23 = vector.load %arg11[%c0_13, %c0_14] : memref<8x32xf32, #tpu.memory_space<vmem>>, vector<8x32xf32>
    tpu.vector_store %arg11[%c0_13, %c0_14], %22 {strides = array<i32>} : memref<8x32xf32, #tpu.memory_space<vmem>>, vector<8x32xf32>,
    %c0_i32_15 = arith.constant 0 : i32
    %24 = arith.cmpi eq, %arg0, %c0_i32_15 : i32
    %25 = arith.extui %24 : i1 to i32
    %c0_i32_16 = arith.constant 0 : i32
    %26 = arith.cmpi ne, %25, %c0_i32_16 : i32
    scf.if %26 {
      %c0_17 = arith.constant 0 : index
      %c0_18 = arith.constant 0 : index
      %27 = vector.load %arg5[%c0_17, %c0_18] : memref<8x32xf32, #tpu.memory_space<vmem>>, vector<8x32xf32>
      %c0_19 = arith.constant 0 : index
      %c0_20 = arith.constant 0 : index
      %28 = vector.load %arg11[%c0_19, %c0_20] : memref<8x32xf32, #tpu.memory_space<vmem>>, vector<8x32xf32>
      %29 = tpu.concatenate %27, %28 in 1 : vector<8x32xf32>, vector<8x32xf32> -> vector<8x64xf32>
      %30 = arith.truncf %29 : vector<8x64xf32> to vector<8x64xbf16>
      %c0_21 = arith.constant 0 : index
      %c0_22 = arith.constant 0 : index
      %31 = vector.load %arg6[%c0_21, %c0_22] : memref<128x64xf32, #tpu.memory_space<vmem>>, vector<128x64xf32>
      %32 = tpu.transpose %31, [1, 0] : vector<128x64xf32> -> vector<64x128xf32>
      %33 = arith.truncf %32 : vector<64x128xf32> to vector<64x128xbf16>
      %cst_23 = arith.constant dense<0.000000e+00> : vector<8x128xf32>
      %34 = tpu.matmul %30, %33, %cst_23 {dimension_numbers = #tpu.dot_dimension_numbers<[1], [0], [0], [1], [0, 0, 1, 1], [], []>} : vector<8x64xbf16>, vector<64x128xbf16>, vector<8x128xf32> -> vector<8x128xf32>
      %c0_24 = arith.constant 0 : index
      %c0_25 = arith.constant 0 : index
      %35 = vector.load %arg9[%c0_24, %c0_25] : memref<8x128xf32, #tpu.memory_space<vmem>>, vector<8x128xf32>
      tpu.vector_store %arg9[%c0_24, %c0_25], %34 {strides = array<i32>} : memref<8x128xf32, #tpu.memory_space<vmem>>, vector<8x128xf32>,
      %c0_26 = arith.constant 0 : index
      %c0_27 = arith.constant 0 : index
      %36 = vector.load %arg7[%c0_26, %c0_27] : memref<8x32xf32, #tpu.memory_space<vmem>>, vector<8x32xf32>
      %37 = arith.truncf %36 : vector<8x32xf32> to vector<8x32xbf16>
      %c0_28 = arith.constant 0 : index
      %c0_29 = arith.constant 0 : index
      %38 = vector.load %arg8[%c0_28, %c0_29] : memref<32x128xf32, #tpu.memory_space<vmem>>, vector<32x128xf32>
      %39 = arith.truncf %38 : vector<32x128xf32> to vector<32x128xbf16>
      %cst_30 = arith.constant dense<0.000000e+00> : vector<8x128xf32>
      %40 = tpu.matmul %37, %39, %cst_30 {dimension_numbers = #tpu.dot_dimension_numbers<[1], [0], [0], [1], [0, 0, 1, 1], [], []>} : vector<8x32xbf16>, vector<32x128xbf16>, vector<8x128xf32> -> vector<8x128xf32>
      %c0_31 = arith.constant 0 : index
      %c0_32 = arith.constant 0 : index
      %41 = vector.load %arg10[%c0_31, %c0_32] : memref<8x128xf32, #tpu.memory_space<vmem>>, vector<8x128xf32>
      tpu.vector_store %arg10[%c0_31, %c0_32], %40 {strides = array<i32>} : memref<8x128xf32, #tpu.memory_space<vmem>>, vector<8x128xf32>,
    } else {
    }
    return
  }
  func.func @transform_0(%arg0: i32) -> (i32, i32) {
    %c0_i32 = arith.constant 0 : i32
    %c0_i32_0 = arith.constant 0 : i32
    return %c0_i32, %arg0 : i32, i32
  }
  func.func @transform_1(%arg0: i32) -> (i32, i32) {
    %c0_i32 = arith.constant 0 : i32
    %c0_i32_0 = arith.constant 0 : i32
    return %arg0, %c0_i32 : i32, i32
  }
  func.func @transform_2(%arg0: i32) -> (i32, i32) {
    %c0_i32 = arith.constant 0 : i32
    %c0_i32_0 = arith.constant 0 : i32
    return %arg0, %c0_i32 : i32, i32
  }
  func.func @transform_3(%arg0: i32) -> (i32, i32) {
    %c0_i32 = arith.constant 0 : i32
    %c0_i32_0 = arith.constant 0 : i32
    %c0_i32_1 = arith.constant 0 : i32
    return %c0_i32, %c0_i32_0 : i32, i32
  }
  func.func @transform_4(%arg0: i32) -> (i32, i32) {
    %c0_i32 = arith.constant 0 : i32
    %c0_i32_0 = arith.constant 0 : i32
    %c0_i32_1 = arith.constant 0 : i32
    return %c0_i32, %c0_i32_0 : i32, i32
  }
  func.func @transform_5(%arg0: i32) -> (i32, i32) {
    %c0_i32 = arith.constant 0 : i32
    %c0_i32_0 = arith.constant 0 : i32
    %c0_i32_1 = arith.constant 0 : i32
    return %c0_i32, %c0_i32_0 : i32, i32
  }
  func.func @transform_6(%arg0: i32) -> (i32, i32) {
    %c0_i32 = arith.constant 0 : i32
    %c0_i32_0 = arith.constant 0 : i32
    %c0_i32_1 = arith.constant 0 : i32
    return %c0_i32, %c0_i32_0 : i32, i32
  }
  func.func @transform_7(%arg0: i32) -> (i32, i32) {
    %c0_i32 = arith.constant 0 : i32
    %c0_i32_0 = arith.constant 0 : i32
    %c0_i32_1 = arith.constant 0 : i32
    return %c0_i32, %c0_i32_0 : i32, i32
  }
  func.func @transform_8(%arg0: i32) -> (i32, i32) {
    %c0_i32 = arith.constant 0 : i32
    %c0_i32_0 = arith.constant 0 : i32
    %c0_i32_1 = arith.constant 0 : i32
    return %c0_i32, %c0_i32_0 : i32, i32
  }
  func.func @transform_9(%arg0: i32) -> (i32, i32) {
    %c0_i32 = arith.constant 0 : i32
    %c0_i32_0 = arith.constant 0 : i32
    %c0_i32_1 = arith.constant 0 : i32
    return %c0_i32, %c0_i32_0 : i32, i32
  }
}

</mosaic_0001>

<llo_original>
// kernel: tpu_custom_call.1
$region0: #{tpu_custom_call.1}
  #allocation0 [shape = 'u32[]', space=smem, size = 0x4, offset = 0x4, fixed_abs, tag = 'smem constant byte address 0x4 - core index']
  #allocation1 [shape = 'u32[144,128]{1,0:T(1,128)}', space=vmem, size = 0x12000, scoped, tag = 'internal scratch']
  #allocation2 [shape = 'f32[8,32]{1,0:T(8,128)}', space=vmem, size = 0x1000, scoped, tag = 'scratch operand']
  %s0 = inlined_call_operand.vmem [shape: s32[1,128], index: 0, kind: input, shape index: {}]
  %s1 = inlined_call_operand.vmem [shape: f32[128,32], index: 1, kind: input, shape index: {}]
  %s2 = inlined_call_operand.vmem [shape: f32[128,32], index: 2, kind: input, shape index: {}]
  %s3 = inlined_call_operand.vmem [shape: f32[32,32], index: 3, kind: input, shape index: {}]
  %s4 = inlined_call_operand.vmem [shape: f32[8,32], index: 4, kind: input, shape index: {}]
  %s5 = inlined_call_operand.vmem [shape: f32[128,64], index: 5, kind: input, shape index: {}]
  %s6 = inlined_call_operand.vmem [shape: f32[8,32], index: 6, kind: input, shape index: {}]
  %s7 = inlined_call_operand.vmem [shape: f32[32,128], index: 7, kind: input, shape index: {}]
  %s8 = inlined_call_operand.hbm [shape: f32[8,128], index: 8, kind: output, shape index: {0}]
  %s9 = inlined_call_operand.hbm [shape: f32[8,128], index: 9, kind: output, shape index: {1}]
  %10 = xla_tuple %s8, %s9
  %s11 = sld [smem:[#allocation0]]
  $region58: #{tpu_custom_call.1} parent=0
    _
  %s13 = ssub.s32 1, %s11
  %s14 = scalar_select 0, %s13, %s11
  $region1: #{tpu_custom_call.1} parent=0
    #allocation3 [shape = 'u8[4096]{0}', space=vmem, size = 0x1000, scoped, tag = 'output window, operand 0, single buffered']
    #allocation4 [shape = 's32[1]{0}', space=sflag, size = 0x4, scoped, tag = 'scoped memory for tpu_custom_call.1']
    #allocation5 [shape = 'u8[4096]{0}', space=vmem, size = 0x1000, scoped, tag = 'output window, operand 1, single buffered']
    #allocation6 [shape = 's32[1]{0}', space=sflag, size = 0x4, scoped, tag = 'scoped memory for tpu_custom_call.1']
    %15 = vsyncpa [#allocation4], 0
    %16 = vsyncpa [#allocation6], 0
    // Predicated region
    $region2: #{tpu_custom_call.1} parent=1 // pred_check
      _
    $region3: #{tpu_custom_call.1} parent=1 // pred_check_branch
      %18 = sbr.rel (0) target = $region5
    $region4: #{tpu_custom_call.1} parent=1 // pred_region
      _
    $region5: #{tpu_custom_call.1} parent=1 // pred_fallthru
      _
    // Predicated region
    $region6: #{tpu_custom_call.1} parent=1 // pred_check
      _
    $region7: #{tpu_custom_call.1} parent=1 // pred_check_branch
      %20 = sbr.rel (0) target = $region9
    $region8: #{tpu_custom_call.1} parent=1 // pred_region
      _
    $region9: #{tpu_custom_call.1} parent=1 // pred_fallthru
      _
    // Predicated region
    $region10: #{tpu_custom_call.1} parent=1 // pred_check
      _
    $region11: #{tpu_custom_call.1} parent=1 // pred_check_branch
      %22 = sbr.rel (0) target = $region13
    $region12: #{tpu_custom_call.1} parent=1 // pred_region
      _
    $region13: #{tpu_custom_call.1} parent=1 // pred_fallthru
      _
    // Predicated region
    $region14: #{tpu_custom_call.1} parent=1 // pred_check
      _
    $region15: #{tpu_custom_call.1} parent=1 // pred_check_branch
      %24 = sbr.rel (0) target = $region17
    $region16: #{tpu_custom_call.1} parent=1 // pred_region
      _
    $region17: #{tpu_custom_call.1} parent=1 // pred_fallthru
      _
    // Predicated region
    $region18: #{tpu_custom_call.1} parent=1 // pred_check
      _
    $region19: #{tpu_custom_call.1} parent=1 // pred_check_branch
      %26 = sbr.rel (0) target = $region21
    $region20: #{tpu_custom_call.1} parent=1 // pred_region
      _
    $region21: #{tpu_custom_call.1} parent=1 // pred_fallthru
      _
    // Predicated region
    $region22: #{tpu_custom_call.1} parent=1 // pred_check
      _
    $region23: #{tpu_custom_call.1} parent=1 // pred_check_branch
      %28 = sbr.rel (0) target = $region25
    $region24: #{tpu_custom_call.1} parent=1 // pred_region
      _
    $region25: #{tpu_custom_call.1} parent=1 // pred_fallthru
      _
    // Predicated region
    $region26: #{tpu_custom_call.1} parent=1 // pred_check
      _
    $region27: #{tpu_custom_call.1} parent=1 // pred_check_branch
      %30 = sbr.rel (0) target = $region29
    $region28: #{tpu_custom_call.1} parent=1 // pred_region
      _
    $region29: #{tpu_custom_call.1} parent=1 // pred_fallthru
      _
    // Predicated region
    $region30: #{tpu_custom_call.1} parent=1 // pred_check
      _
    $region31: #{tpu_custom_call.1} parent=1 // pred_check_branch
      %32 = sbr.rel (0) target = $region33
    $region32: #{tpu_custom_call.1} parent=1 // pred_region
      _
    $region33: #{tpu_custom_call.1} parent=1 // pred_fallthru
      _
    %p34 = scmp.eq.s32.totalorder 0, 0
    // Predicated region
    $region34: #{tpu_custom_call.1} parent=1 // pred_check
      %p35 = pneg %p34
    $region35: #{tpu_custom_call.1} parent=1 // pred_check_branch
      %37 = sbr.rel (%p35) target = $region37
    $region36: #{tpu_custom_call.1} parent=1 // pred_region
      %vm38 = vcmask 261120
      %39 = vst.msk [vmem:[#allocation2] sm:$0xff] %vm38, 0.0
    $region37: #{tpu_custom_call.1} parent=1 // pred_fallthru
      _
    %v40 = vld [vmem:[%s1] sm:$0xff]
    %v41 = vld [vmem:[%s1 + $0x8] sm:$0xff]
    %v42 = vld [vmem:[%s1 + $0x10] sm:$0xff]
    %v43 = vld [vmem:[%s1 + $0x18] sm:$0xff]
    %v44 = vld [vmem:[%s1 + $0x20] sm:$0xff]
    %v45 = vld [vmem:[%s1 + $0x28] sm:$0xff]
    %v46 = vld [vmem:[%s1 + $0x30] sm:$0xff]
    %v47 = vld [vmem:[%s1 + $0x38] sm:$0xff]
    %v48 = vld [vmem:[%s1 + $0x40] sm:$0xff]
    %v49 = vld [vmem:[%s1 + $0x48] sm:$0xff]
    %v50 = vld [vmem:[%s1 + $0x50] sm:$0xff]
    %v51 = vld [vmem:[%s1 + $0x58] sm:$0xff]
    %v52 = vld [vmem:[%s1 + $0x60] sm:$0xff]
    %v53 = vld [vmem:[%s1 + $0x68] sm:$0xff]
    %v54 = vld [vmem:[%s1 + $0x70] sm:$0xff]
    %v55 = vld [vmem:[%s1 + $0x78] sm:$0xff]
    %v56 = vld [vmem:[%s2] sm:$0xff]
    %v57 = vld [vmem:[%s2 + $0x8] sm:$0xff]
    %v58 = vld [vmem:[%s2 + $0x10] sm:$0xff]
    %v59 = vld [vmem:[%s2 + $0x18] sm:$0xff]
    %v60 = vld [vmem:[%s2 + $0x20] sm:$0xff]
    %v61 = vld [vmem:[%s2 + $0x28] sm:$0xff]
    %v62 = vld [vmem:[%s2 + $0x30] sm:$0xff]
    %v63 = vld [vmem:[%s2 + $0x38] sm:$0xff]
    %v64 = vld [vmem:[%s2 + $0x40] sm:$0xff]
    %v65 = vld [vmem:[%s2 + $0x48] sm:$0xff]
    %v66 = vld [vmem:[%s2 + $0x50] sm:$0xff]
    %v67 = vld [vmem:[%s2 + $0x58] sm:$0xff]
    %v68 = vld [vmem:[%s2 + $0x60] sm:$0xff]
    %v69 = vld [vmem:[%s2 + $0x68] sm:$0xff]
    %v70 = vld [vmem:[%s2 + $0x70] sm:$0xff]
    %v71 = vld [vmem:[%s2 + $0x78] sm:$0xff]
    %v72 = vmul.f32 %v40, %v56
    %v73 = vmul.f32 %v41, %v57
    %v74 = vmul.f32 %v42, %v58
    %v75 = vmul.f32 %v43, %v59
    %v76 = vmul.f32 %v44, %v60
    %v77 = vmul.f32 %v45, %v61
    %v78 = vmul.f32 %v46, %v62
    %v79 = vmul.f32 %v47, %v63
    %v80 = vmul.f32 %v48, %v64
    %v81 = vmul.f32 %v49, %v65
    %v82 = vmul.f32 %v50, %v66
    %v83 = vmul.f32 %v51, %v67
    %v84 = vmul.f32 %v52, %v68
    %v85 = vmul.f32 %v53, %v69
    %v86 = vmul.f32 %v54, %v70
    %v87 = vmul.f32 %v55, %v71
    %v88 = vpack.c.bf16 %v73, %v72
    %v89 = vpack.c.bf16 %v75, %v74
    %v90 = vpack.c.bf16 %v77, %v76
    %v91 = vpack.c.bf16 %v79, %v78
    %v92 = vpack.c.bf16 %v81, %v80
    %v93 = vpack.c.bf16 %v83, %v82
    %v94 = vpack.c.bf16 %v85, %v84
    %v95 = vpack.c.bf16 %v87, %v86
    %v96 = vld [vmem:[%s3] sm:$0xff]
    %v97 = vld [vmem:[%s3 + $0x8] sm:$0xff]
    %v98 = vld [vmem:[%s3 + $0x10] sm:$0xff]
    %v99 = vld [vmem:[%s3 + $0x18] sm:$0xff]
    %100 = vxpose.xlu0.b32.start [1/16] %v96, 128
    %101 = vxpose.xlu0.b32.cont [2/16] %v97, 128
    %102 = vxpose.xlu0.b32.cont [3/16] %v98, 128
    %103 = vxpose.xlu0.b32.cont [4/16] %v99, 128
    %104 = vxpose.xlu0.b32.cont [5/16] 0.0, 128
    %105 = vxpose.xlu0.b32.cont [6/16] 0.0, 128
    %106 = vxpose.xlu0.b32.cont [7/16] 0.0, 128
    %107 = vxpose.xlu0.b32.cont [8/16] 0.0, 128
    %108 = vxpose.xlu0.b32.cont [9/16] 0.0, 128
    %109 = vxpose.xlu0.b32.cont [10/16] 0.0, 128
    %110 = vxpose.xlu0.b32.cont [11/16] 0.0, 128
    %111 = vxpose.xlu0.b32.cont [12/16] 0.0, 128
    %112 = vxpose.xlu0.b32.cont [13/16] 0.0, 128
    %113 = vxpose.xlu0.b32.cont [14/16] 0.0, 128
    %114 = vxpose.xlu0.b32.cont [15/16] 0.0, 128
    %115 = vxpose.xlu0.b32.end [16/16] 0.0, 128
    %v116 = vpop.trf.xlu0
    %v117 = vpop.trf.xlu0
    %v118 = vpop.trf.xlu0
    %v119 = vpop.trf.xlu0
    %v120 = vpop.trf.xlu0
    %v121 = vpop.trf.xlu0
    %v122 = vpop.trf.xlu0
    %v123 = vpop.trf.xlu0
    %v124 = vpop.trf.xlu0
    %v125 = vpop.trf.xlu0
    %v126 = vpop.trf.xlu0
    %v127 = vpop.trf.xlu0
    %v128 = vpop.trf.xlu0
    %v129 = vpop.trf.xlu0
    %v130 = vpop.trf.xlu0
    %v131 = vpop.trf.xlu0
    %v132 = vpack.c.bf16 %v117, %v116
    %v133 = vpack.c.bf16 %v119, %v118
    %vm134 = vcmask 261120
    %v136 = vsel %vm134, %v88, 0
    %v139 = vsel %vm134, %v89, 0
    %v142 = vsel %vm134, %v90, 0
    %v145 = vsel %vm134, %v91, 0
    %v148 = vsel %vm134, %v92, 0
    %v151 = vsel %vm134, %v93, 0
    %v154 = vsel %vm134, %v94, 0
    %v157 = vsel %vm134, %v95, 0
    %159 = vmatprep.subr.bf16.mxu0 0
    %160 = vmatpush1.bf16.msra.mxu0 0
    %161 = vmatprep.subr.bf16.mxu0 0
    %162 = vmatpush1.bf16.msra.mxu0 0
    %163 = vmatprep.subr.bf16.mxu0 0
    %164 = vmatpush1.bf16.msra.mxu0 0
    %165 = vmatprep.subr.bf16.mxu0 0
    %166 = vmatpush1.bf16.msra.mxu0 0
    %167 = vmatprep.subr.bf16.mxu0 0
    %168 = vmatpush1.bf16.msra.mxu0 0
    %169 = vmatprep.subr.bf16.mxu0 0
    %170 = vmatpush1.bf16.msra.mxu0 0
    %171 = vmatprep.subr.bf16.mxu0 0
    %172 = vmatpush1.bf16.msra.mxu0 %v133
    %173 = vmatprep.subr.bf16.mxu0 0
    %174 = vmatpush1.bf16.msra.mxu0 %v132
    %175 = vmatprep.subr.bf16.mxu0 0
    %176 = vmatpush2.bf16.msra.mxu0 0
    %177 = vmatprep.subr.bf16.mxu0 0
    %178 = vmatpush2.bf16.msra.mxu0 0
    %179 = vmatprep.subr.bf16.mxu0 0
    %180 = vmatpush2.bf16.msra.mxu0 0
    %181 = vmatprep.subr.bf16.mxu0 0
    %182 = vmatpush2.bf16.msra.mxu0 0
    %183 = vmatprep.subr.bf16.mxu0 0
    %184 = vmatpush2.bf16.msra.mxu0 0
    %185 = vmatprep.subr.bf16.mxu0 0
    %186 = vmatpush2.bf16.msra.mxu0 0
    %187 = vmatprep.subr.bf16.mxu0 0
    %188 = vmatpush2.bf16.msra.mxu0 0
    %189 = vmatprep.subr.bf16.mxu0 0
    %190 = vmatpush2.bf16.msra.mxu0 0
    %191 = vmatprep.mubr.bf16.mxu0 0
    %192 = vmatmul.mubr.bf16.gmra.mxu0 %v136
    %v193 = vpop.f32.mrf.mxu0
    %v194 = vadd.f32 0.0, %v193
    %v195 = vpop.f32.mrf.mxu0
    %v196 = vpop.f32.mrf.mxu0
    %v197 = vadd.f32 0.0, %v196
    %v198 = vpop.f32.mrf.mxu0
    %199 = vmatprep.mubr.bf16.mxu0 0
    %200 = vmatmul.mubr.bf16.gmra.mxu0 %v139
    %v201 = vpop.f32.mrf.mxu0
    %v202 = vadd.f32 0.0, %v201
    %v203 = vpop.f32.mrf.mxu0
    %v204 = vpop.f32.mrf.mxu0
    %v205 = vadd.f32 0.0, %v204
    %v206 = vpop.f32.mrf.mxu0
    %207 = vmatprep.mubr.bf16.mxu0 0
    %208 = vmatmul.mubr.bf16.gmra.mxu0 %v142
    %v209 = vpop.f32.mrf.mxu0
    %v210 = vadd.f32 0.0, %v209
    %v211 = vpop.f32.mrf.mxu0
    %v212 = vpop.f32.mrf.mxu0
    %v213 = vadd.f32 0.0, %v212
    %v214 = vpop.f32.mrf.mxu0
    %215 = vmatprep.mubr.bf16.mxu0 0
    %216 = vmatmul.mubr.bf16.gmra.mxu0 %v145
    %v217 = vpop.f32.mrf.mxu0
    %v218 = vadd.f32 0.0, %v217
    %v219 = vpop.f32.mrf.mxu0
    %v220 = vpop.f32.mrf.mxu0
    %v221 = vadd.f32 0.0, %v220
    %v222 = vpop.f32.mrf.mxu0
    %223 = vmatprep.mubr.bf16.mxu0 0
    %224 = vmatmul.mubr.bf16.gmra.mxu0 %v148
    %v225 = vpop.f32.mrf.mxu0
    %v226 = vadd.f32 0.0, %v225
    %v227 = vpop.f32.mrf.mxu0
    %v228 = vpop.f32.mrf.mxu0
    %v229 = vadd.f32 0.0, %v228
    %v230 = vpop.f32.mrf.mxu0
    %231 = vmatprep.mubr.bf16.mxu0 0
    %232 = vmatmul.mubr.bf16.gmra.mxu0 %v151
    %v233 = vpop.f32.mrf.mxu0
    %v234 = vadd.f32 0.0, %v233
    %v235 = vpop.f32.mrf.mxu0
    %v236 = vpop.f32.mrf.mxu0
    %v237 = vadd.f32 0.0, %v236
    %v238 = vpop.f32.mrf.mxu0
    %239 = vmatprep.mubr.bf16.mxu0 0
    %240 = vmatmul.mubr.bf16.gmra.mxu0 %v154
    %v241 = vpop.f32.mrf.mxu0
    %v242 = vadd.f32 0.0, %v241
    %v243 = vpop.f32.mrf.mxu0
    %v244 = vpop.f32.mrf.mxu0
    %v245 = vadd.f32 0.0, %v244
    %v246 = vpop.f32.mrf.mxu0
    %247 = vmatprep.mubr.bf16.mxu0 0
    %248 = vmatmul.mubr.bf16.gmra.mxu0 %v157
    %v249 = vpop.f32.mrf.mxu0
    %v250 = vadd.f32 0.0, %v249
    %v251 = vpop.f32.mrf.mxu0
    %v252 = vpop.f32.mrf.mxu0
    %v253 = vadd.f32 0.0, %v252
    %v254 = vpop.f32.mrf.mxu0
    %255 = vdwg.mxu0
    %v256 = vlaneseq
    %v257 = vshrl.u32 %v256, 7
    %v258 = vld [vmem:[%s0] sm:$0x1]
    %v259 = vlaneseq
    %v260 = vshrl.u32 %v259, 7
    %v261 = vsub.s32 0, %v260
    %v262 = vrot.slane %v258, %v261
    %vm263 = vcmp.eq.s32.totalorder %v262, %v257
    %v264 = vsel %vm263, 1.0, 0.0
    %v265 = vpack.c.bf16 %v264, %v264
    %v266 = vld [vmem:[#allocation2] sm:$0xff]
    %v267 = vpack.c.bf16 %v197, %v194
    %v268 = vpack.c.bf16 %v205, %v202
    %v269 = vpack.c.bf16 %v213, %v210
    %v270 = vpack.c.bf16 %v221, %v218
    %v271 = vpack.c.bf16 %v229, %v226
    %v272 = vpack.c.bf16 %v237, %v234
    %v273 = vpack.c.bf16 %v245, %v242
    %v274 = vpack.c.bf16 %v253, %v250
    %275 = vmatprep.subr.bf16.mxu0 0
    %276 = vmatpush1.bf16.msra.mxu0 %v274
    %277 = vmatprep.subr.bf16.mxu0 0
    %278 = vmatpush1.bf16.msra.mxu0 %v273
    %279 = vmatprep.subr.bf16.mxu0 0
    %280 = vmatpush1.bf16.msra.mxu0 %v272
    %281 = vmatprep.subr.bf16.mxu0 0
    %282 = vmatpush1.bf16.msra.mxu0 %v271
    %283 = vmatprep.subr.bf16.mxu0 0
    %284 = vmatpush1.bf16.msra.mxu0 %v270
    %285 = vmatprep.subr.bf16.mxu0 0
    %286 = vmatpush1.bf16.msra.mxu0 %v269
    %287 = vmatprep.subr.bf16.mxu0 0
    %288 = vmatpush1.bf16.msra.mxu0 %v268
    %289 = vmatprep.subr.bf16.mxu0 0
    %290 = vmatpush1.bf16.msra.mxu0 %v267
    %291 = vmatprep.subr.bf16.mxu0 0
    %292 = vmatpush2.bf16.msra.mxu0 0
    %293 = vmatprep.subr.bf16.mxu0 0
    %294 = vmatpush2.bf16.msra.mxu0 0
    %295 = vmatprep.subr.bf16.mxu0 0
    %296 = vmatpush2.bf16.msra.mxu0 0
    %297 = vmatprep.subr.bf16.mxu0 0
    %298 = vmatpush2.bf16.msra.mxu0 0
    %299 = vmatprep.subr.bf16.mxu0 0
    %300 = vmatpush2.bf16.msra.mxu0 0
    %301 = vmatprep.subr.bf16.mxu0 0
    %302 = vmatpush2.bf16.msra.mxu0 0
    %303 = vmatprep.subr.bf16.mxu0 0
    %304 = vmatpush2.bf16.msra.mxu0 0
    %305 = vmatprep.subr.bf16.mxu0 0
    %306 = vmatpush2.bf16.msra.mxu0 0
    %307 = vmatprep.mubr.bf16.mxu0 0
    %308 = vmatmul.mubr.bf16.gmra.mxu0 %v265
    %v309 = vpop.f32.mrf.mxu0
    %v310 = vadd.f32 0.0, %v309
    %v311 = vpop.f32.mrf.mxu0
    %v312 = vpop.f32.mrf.mxu0
    %v313 = vpop.f32.mrf.mxu0
    %314 = vdwg.mxu0
    %v315 = vadd.f32 %v266, %v310
    %316 = vst.msk [vmem:[#allocation2] sm:$0xff] %vm134, %v315
    // Predicated region
    $region38: #{tpu_custom_call.1} parent=1 // pred_check
      %p317 = pneg %p34
    $region39: #{tpu_custom_call.1} parent=1 // pred_check_branch
      %319 = sbr.rel (%p317) target = $region41
    $region40: #{tpu_custom_call.1} parent=1 // pred_region
      %v320 = vld [vmem:[%s4] sm:$0xff]
      %v321 = vld [vmem:[#allocation2] sm:$0xff]
      %323 = vrot.lane.b32.xlu0 %v321, 32
      %v324 = vpop.permute.xlu0 %323
      %v326 = vsel %vm134, %v320, %v324
      %v327 = vpack.c.bf16 %v326, %v326
      %v328 = vld [vmem:[%s5] sm:$0xff]
      %v329 = vld [vmem:[%s5 + $0x8] sm:$0xff]
      %v330 = vld [vmem:[%s5 + $0x10] sm:$0xff]
      %v331 = vld [vmem:[%s5 + $0x18] sm:$0xff]
      %v332 = vld [vmem:[%s5 + $0x20] sm:$0xff]
      %v333 = vld [vmem:[%s5 + $0x28] sm:$0xff]
      %v334 = vld [vmem:[%s5 + $0x30] sm:$0xff]
      %v335 = vld [vmem:[%s5 + $0x38] sm:$0xff]
      %v336 = vld [vmem:[%s5 + $0x40] sm:$0xff]
      %v337 = vld [vmem:[%s5 + $0x48] sm:$0xff]
      %v338 = vld [vmem:[%s5 + $0x50] sm:$0xff]
      %v339 = vld [vmem:[%s5 + $0x58] sm:$0xff]
      %v340 = vld [vmem:[%s5 + $0x60] sm:$0xff]
      %v341 = vld [vmem:[%s5 + $0x68] sm:$0xff]
      %v342 = vld [vmem:[%s5 + $0x70] sm:$0xff]
      %v343 = vld [vmem:[%s5 + $0x78] sm:$0xff]
      %344 = vxpose.xlu0.b32.start [1/16] %v328, 128
      %345 = vxpose.xlu0.b32.cont [2/16] %v329, 128
      %346 = vxpose.xlu0.b32.cont [3/16] %v330, 128
      %347 = vxpose.xlu0.b32.cont [4/16] %v331, 128
      %348 = vxpose.xlu0.b32.cont [5/16] %v332, 128
      %349 = vxpose.xlu0.b32.cont [6/16] %v333, 128
      %350 = vxpose.xlu0.b32.cont [7/16] %v334, 128
      %351 = vxpose.xlu0.b32.cont [8/16] %v335, 128
      %352 = vxpose.xlu0.b32.cont [9/16] %v336, 128
      %353 = vxpose.xlu0.b32.cont [10/16] %v337, 128
      %354 = vxpose.xlu0.b32.cont [11/16] %v338, 128
      %355 = vxpose.xlu0.b32.cont [12/16] %v339, 128
      %356 = vxpose.xlu0.b32.cont [13/16] %v340, 128
      %357 = vxpose.xlu0.b32.cont [14/16] %v341, 128
      %358 = vxpose.xlu0.b32.cont [15/16] %v342, 128
      %359 = vxpose.xlu0.b32.end [16/16] %v343, 128
      %v360 = vpop.trf.xlu0
      %v361 = vpop.trf.xlu0
      %v362 = vpop.trf.xlu0
      %v363 = vpop.trf.xlu0
      %v364 = vpop.trf.xlu0
      %v365 = vpop.trf.xlu0
      %v366 = vpop.trf.xlu0
      %v367 = vpop.trf.xlu0
      %v368 = vpop.trf.xlu0
      %v369 = vpop.trf.xlu0
      %v370 = vpop.trf.xlu0
      %v371 = vpop.trf.xlu0
      %v372 = vpop.trf.xlu0
      %v373 = vpop.trf.xlu0
      %v374 = vpop.trf.xlu0
      %v375 = vpop.trf.xlu0
      %v376 = vpack.c.bf16 %v361, %v360
      %v377 = vpack.c.bf16 %v363, %v362
      %v378 = vpack.c.bf16 %v365, %v364
      %v379 = vpack.c.bf16 %v367, %v366
      %vm380 = vcmask 523264
      %v382 = vsel %vm380, %v327, 0
      %384 = vmatprep.subr.bf16.mxu0 0
      %385 = vmatpush1.bf16.msra.mxu0 0
      %386 = vmatprep.subr.bf16.mxu0 0
      %387 = vmatpush1.bf16.msra.mxu0 0
      %388 = vmatprep.subr.bf16.mxu0 0
      %389 = vmatpush1.bf16.msra.mxu0 0
      %390 = vmatprep.subr.bf16.mxu0 0
      %391 = vmatpush1.bf16.msra.mxu0 0
      %392 = vmatprep.subr.bf16.mxu0 0
      %393 = vmatpush1.bf16.msra.mxu0 %v379
      %394 = vmatprep.subr.bf16.mxu0 0
      %395 = vmatpush1.bf16.msra.mxu0 %v378
      %396 = vmatprep.subr.bf16.mxu0 0
      %397 = vmatpush1.bf16.msra.mxu0 %v377
      %398 = vmatprep.subr.bf16.mxu0 0
      %399 = vmatpush1.bf16.msra.mxu0 %v376
      %400 = vmatprep.subr.bf16.mxu0 0
      %401 = vmatpush2.bf16.msra.mxu0 0
      %402 = vmatprep.subr.bf16.mxu0 0
      %403 = vmatpush2.bf16.msra.mxu0 0
      %404 = vmatprep.subr.bf16.mxu0 0
      %405 = vmatpush2.bf16.msra.mxu0 0
      %406 = vmatprep.subr.bf16.mxu0 0
      %407 = vmatpush2.bf16.msra.mxu0 0
      %408 = vmatprep.subr.bf16.mxu0 0
      %409 = vmatpush2.bf16.msra.mxu0 0
      %410 = vmatprep.subr.bf16.mxu0 0
      %411 = vmatpush2.bf16.msra.mxu0 0
      %412 = vmatprep.subr.bf16.mxu0 0
      %413 = vmatpush2.bf16.msra.mxu0 0
      %414 = vmatprep.subr.bf16.mxu0 0
      %415 = vmatpush2.bf16.msra.mxu0 0
      %416 = vmatprep.mubr.bf16.mxu0 0
      %417 = vmatmul.mubr.bf16.gmra.mxu0 %v382
      %v418 = vpop.f32.mrf.mxu0
      %v419 = vadd.f32 0.0, %v418
      %v420 = vpop.f32.mrf.mxu0
      %v421 = vpop.f32.mrf.mxu0
      %v422 = vpop.f32.mrf.mxu0
      %423 = vdwg.mxu0
      %424 = vst [vmem:[#allocation3] sm:$0xff] %v419
      %v425 = vld [vmem:[%s6] sm:$0xff]
      %v426 = vpack.c.bf16 %v425, %v425
      %v427 = vld [vmem:[%s7] sm:$0xff]
      %v428 = vld [vmem:[%s7 + $0x8] sm:$0xff]
      %v429 = vld [vmem:[%s7 + $0x10] sm:$0xff]
      %v430 = vld [vmem:[%s7 + $0x18] sm:$0xff]
      %v431 = vpack.c.bf16 %v428, %v427
      %v432 = vpack.c.bf16 %v430, %v429
      %v434 = vsel %vm134, %v426, 0
      %436 = vmatprep.subr.bf16.mxu0 0
      %437 = vmatpush1.bf16.msra.mxu0 0
      %438 = vmatprep.subr.bf16.mxu0 0
      %439 = vmatpush1.bf16.msra.mxu0 0
      %440 = vmatprep.subr.bf16.mxu0 0
      %441 = vmatpush1.bf16.msra.mxu0 0
      %442 = vmatprep.subr.bf16.mxu0 0
      %443 = vmatpush1.bf16.msra.mxu0 0
      %444 = vmatprep.subr.bf16.mxu0 0
      %445 = vmatpush1.bf16.msra.mxu0 0
      %446 = vmatprep.subr.bf16.mxu0 0
      %447 = vmatpush1.bf16.msra.mxu0 0
      %448 = vmatprep.subr.bf16.mxu0 0
      %449 = vmatpush1.bf16.msra.mxu0 %v432
      %450 = vmatprep.subr.bf16.mxu0 0
      %451 = vmatpush1.bf16.msra.mxu0 %v431
      %452 = vmatprep.subr.bf16.mxu0 0
      %453 = vmatpush2.bf16.msra.mxu0 0
      %454 = vmatprep.subr.bf16.mxu0 0
      %455 = vmatpush2.bf16.msra.mxu0 0
      %456 = vmatprep.subr.bf16.mxu0 0
      %457 = vmatpush2.bf16.msra.mxu0 0
      %458 = vmatprep.subr.bf16.mxu0 0
      %459 = vmatpush2.bf16.msra.mxu0 0
      %460 = vmatprep.subr.bf16.mxu0 0
      %461 = vmatpush2.bf16.msra.mxu0 0
      %462 = vmatprep.subr.bf16.mxu0 0
      %463 = vmatpush2.bf16.msra.mxu0 0
      %464 = vmatprep.subr.bf16.mxu0 0
      %465 = vmatpush2.bf16.msra.mxu0 0
      %466 = vmatprep.subr.bf16.mxu0 0
      %467 = vmatpush2.bf16.msra.mxu0 0
      %468 = vmatprep.mubr.bf16.mxu0 0
      %469 = vmatmul.mubr.bf16.gmra.mxu0 %v434
      %v470 = vpop.f32.mrf.mxu0
      %v471 = vadd.f32 0.0, %v470
      %v472 = vpop.f32.mrf.mxu0
      %v473 = vpop.f32.mrf.mxu0
      %v474 = vpop.f32.mrf.mxu0
      %475 = vdwg.mxu0
      %476 = vst [vmem:[#allocation5] sm:$0xff] %v471
    $region41: #{tpu_custom_call.1} parent=1 // pred_fallthru
      _
    // Predicated region
    $region42: #{tpu_custom_call.1} parent=1 // pred_check
      _
    $region43: #{tpu_custom_call.1} parent=1 // pred_check_branch
      %478 = sbr.rel (0) target = $region45
    $region44: #{tpu_custom_call.1} parent=1 // pred_region
      %s480 = ssub.s32 128, 128
      %481 = vsyncadd [#allocation4], %s480
      %s483 = sshll.u32 [#allocation3], 4
      %s484 = int_to_ptr.vmem [resolvable:$true] %s483
      %486 = dma.vmem_to_hbm [thread:$0]  %s484, 128, %s8, [#allocation4]
    $region45: #{tpu_custom_call.1} parent=1 // pred_fallthru
      _
    // Predicated region
    $region46: #{tpu_custom_call.1} parent=1 // pred_check
      _
    $region47: #{tpu_custom_call.1} parent=1 // pred_check_branch
      %488 = sbr.rel (0) target = $region49
    $region48: #{tpu_custom_call.1} parent=1 // pred_region
      %s490 = ssub.s32 128, 128
      %491 = vsyncadd [#allocation6], %s490
      %s493 = sshll.u32 [#allocation5], 4
      %s494 = int_to_ptr.vmem [resolvable:$true] %s493
      %496 = dma.vmem_to_hbm [thread:$0]  %s494, 128, %s9, [#allocation6]
    $region49: #{tpu_custom_call.1} parent=1 // pred_fallthru
      _
    // Predicated region
    $region50: #{tpu_custom_call.1} parent=1 // pred_check
      _
    $region51: #{tpu_custom_call.1} parent=1 // pred_check_branch
      %498 = sbr.rel (0) target = $region53
    $region52: #{tpu_custom_call.1} parent=1 // pred_region
      %499 = dma.done [#allocation4], 128
    $region53: #{tpu_custom_call.1} parent=1 // pred_fallthru
      _
    // Predicated region
    $region54: #{tpu_custom_call.1} parent=1 // pred_check
      _
    $region55: #{tpu_custom_call.1} parent=1 // pred_check_branch
      %501 = sbr.rel (0) target = $region57
    $region56: #{tpu_custom_call.1} parent=1 // pred_region
      %502 = dma.done [#allocation6], 128
    $region57: #{tpu_custom_call.1} parent=1 // pred_fallthru
      _
    %503 = vsyncpa [#allocation4], 1
    %504 = vsyncpa [#allocation6], 1

</llo_original>
